<compile_context>
chip_gen: v5e
topology: v5e:2x2
jax: 0.10.0
libtpu: 0.0.40
codegen_flags: <defaults>
</compile_context>

<pallas_src>
import functools
import math

import numpy as np

import jax
import jax.numpy as jnp
from jax.experimental import pallas as pl
from jax.experimental.pallas import tpu as pltpu


# --------------------------------------------------------------------------
# Weight construction (static; mirrors the PyTorch module exactly)
# --------------------------------------------------------------------------
def _gaussian_taps_1d(kernel_size: int, sigma: float) -> np.ndarray:
    """1-D taps whose outer product equals the module's normalized 2-D kernel."""
    if kernel_size % 2 == 0:
        raise ValueError("Kernel size must be odd.")
    i = np.arange(kernel_size, dtype=np.float64)
    mean = (kernel_size - 1) / 2.0
    # NOTE: keeps the module's exp(-((x-mean)/(2*sigma))**2) quirk
    # (effective sigma = sqrt(2) * nominal sigma), matching PyTorch exactly.
    g = (1.0 / (sigma * math.sqrt(2.0 * math.pi))) * np.exp(
        -(((i - mean) / (2.0 * sigma)) ** 2)
    )
    return g / g.sum()


def make_gaussian_kernel(kernel_size: int, sigma: float, dim: int = 2) -> jnp.ndarray:
    """Exactly mirrors the PyTorch __init__ 2-D kernel construction (for the ref)."""
    if kernel_size % 2 == 0:
        raise ValueError("Kernel size must be odd.")
    sizes = [kernel_size] * dim
    sigmas = [sigma] * dim
    grids = jnp.meshgrid(
        *[jnp.arange(s, dtype=jnp.float32) for s in sizes], indexing="xy"
    )
    kernel = jnp.array(1.0, dtype=jnp.float32)
    for size, std, mgrid in zip(sizes, sigmas, grids):
        mean = (size - 1) / 2
        kernel = kernel * (
            1.0 / (std * math.sqrt(2 * math.pi))
            * jnp.exp(-(((mgrid - mean) / (2 * std)) ** 2))
        )
    return kernel / jnp.sum(kernel)  # (K, K) float32


# --------------------------------------------------------------------------
# Pallas kernel
# --------------------------------------------------------------------------
def _smooth_kernel(x_ref, o_ref, tmp_ref, *, taps, cb, hp, wp, pad, use_bf16):
    """One channel-block: separable Gaussian blur with 'same' zero padding.

    x_ref:   (CB, Hp, Wp)       input channel block (lane-dense, zero padded)
    o_ref:   (CB, Hp, Wp)       output channel block
    tmp_ref: (CB, Hp+2P, Wp)    VMEM scratch: row-pass result with zero halo in H
    taps:    K Python floats (1-D normalized Gaussian), baked as constants
    """
    k = len(taps)

    # ---- Build the banded row-pass matrix in-register -----------------------
    # B[i, j] = taps[i - j + P] when |i - j| <= P (zeros fold the W padding).
    # A few hundred VPU ops; avoids an HBM operand + its double-buffered VMEM
    # copy, and is safe under megacore sharding (no pid==0 initialization).
    row = jax.lax.broadcasted_iota(jnp.int32, (wp, wp), 0)
    col = jax.lax.broadcasted_iota(jnp.int32, (wp, wp), 1)
    diff = row - col
    band = jnp.zeros((wp, wp), jnp.float32)
    for t in range(k):
        band = band + jnp.where(diff == (t - pad), jnp.float32(taps[t]), 0.0)

    # ---- Row pass (lane / W direction) on the MXU ---------------------------
    # Hp is a multiple of 8 and Wp a multiple of 128, so this reshape is a
    # no-copy relayout (sublane-aligned merge of the leading dims).
    x2 = x_ref[...].reshape(cb * hp, wp)
    if use_bf16:
        y2 = jnp.dot(
            x2.astype(jnp.bfloat16),
            band.astype(jnp.bfloat16),
            preferred_element_type=jnp.float32,
        )
    else:
        y2 = jnp.dot(x2, band, preferred_element_type=jnp.float32)

    # ---- Stage into the zero-halo (along H) VMEM scratch ---------------------
    # Halo is re-zeroed every step (cheap: 2P rows) because the grid axis is
    # "parallel" -> a pid==0-only init would be skipped on the second core.
    if pad > 0:
        zero_rows = jnp.zeros((cb, pad, wp), jnp.float32)
        tmp_ref[:, pl.ds(0, pad), :] = zero_rows
        tmp_ref[:, pl.ds(pad + hp, pad), :] = zero_rows
    tmp_ref[:, pl.ds(pad, hp), :] = y2.reshape(cb, hp, wp)

    # ---- Column pass (sublane / H direction) on the VPU ----------------------
    # Exploit Gaussian symmetry: taps[t] == taps[k-1-t] -> ceil(K/2) multiplies.
    acc = taps[pad] * tmp_ref[:, pl.ds(pad, hp), :]
    for t in range(pad):
        acc = acc + taps[t] * (
            tmp_ref[:, pl.ds(t, hp), :] + tmp_ref[:, pl.ds(k - 1 - t, hp), :]
        )
    o_ref[...] = acc.astype(o_ref.dtype)


# --------------------------------------------------------------------------
# VMEM budgeting / block sizing (generation-aware)
# --------------------------------------------------------------------------
def _cdiv(a: int, b: int) -> int:
    return -(-a // b)


def _round_up(a: int, m: int) -> int:
    return _cdiv(a, m) * m


def _vmem_budget_and_limit():
    """Generation-aware (budget, vmem_limit_bytes)."""
    cap = 0
    try:
        cap = int(getattr(pltpu.get_tpu_info(), "vmem_capacity_bytes", 0))
    except Exception:
        cap = 0
    if cap <= 0:
        # Conservative fallback valid on every generation (v7x has 64 MiB).
        cap = 64 * 1024 * 1024
    # Scoped limit: ~75% of physical, capped at 100 MiB (v5e/v6e: ~96 MiB,
    # v7x: 48 MiB).  Block budget leaves headroom under the limit.
    limit = min(int(0.75 * cap), 100 * 1024 * 1024)
    budget = int(0.65 * limit)
    return budget, limit


def _pick_channel_block(C, Hp, Wp, P, budget_bytes):
    """Balanced channel split sized from the VMEM budget (all residents)."""
    # Per-channel f32 residents: double-buffered input block (2) + output
    # block (2), halo scratch (Hp+2P), y2/acc/x2 value temporaries (~3).
    per_channel = 4 * Wp * (7 * Hp + 2 * P)
    # Fixed residents: band matrix value + build temporaries (~2 copies).
    fixed = 8 * Wp * Wp
    avail = max(budget_bytes - fixed, per_channel)
    cb_max = max(1, min(C, avail // per_channel))

    # Balanced split (no divisibility-collapse): let a ragged last block be
    # handled by Pallas block padding/masking (safe: per-channel output).
    n_steps = _cdiv(C, cb_max)
    if C >= 2:
        # Keep >= 2 steps (pipelining) and prefer an even count so v7x's two
        # TensorCores sharded by dimension_semantics=("parallel",) balance.
        n_steps = max(n_steps, 2)
        if n_steps % 2 == 1 and n_steps + 1 <= C:
            n_steps += 1
    n_steps = min(n_steps, C)
    cb = _cdiv(C, n_steps)
    grid_steps = _cdiv(C, cb)
    return int(cb), int(grid_steps)


# --------------------------------------------------------------------------
# Wrapper
# --------------------------------------------------------------------------
def gaussian_smoothing(
    x: jnp.ndarray,
    kernel_size: int,
    sigma: float,
    *,
    use_bf16_rowpass: bool = False,   # opt-in (~1e-3 rel err); default keeps f32 exactness
) -> jnp.ndarray:
    """x: (C, H, W) -> (C, H, W) depthwise 'same' Gaussian blur."""
    C, H, W = x.shape
    K = int(kernel_size)
    if K % 2 == 0:
        raise ValueError("Kernel size must be odd.")
    P = (K - 1) // 2

    taps = tuple(float(v) for v in _gaussian_taps_1d(K, sigma))

    # Lane-dense / sublane-aligned padding.  Zero fill == the conv's 'same'
    # zero padding, so padded rows/cols never corrupt the real region.
    Hp = _round_up(max(H, 8), 8)
    Wp = _round_up(max(W, 128), 128)
    xp = x.astype(jnp.float32)
    if (Hp, Wp) != (H, W):
        xp = jnp.pad(xp, ((0, 0), (0, Hp - H), (0, Wp - W)))

    budget, vmem_limit = _vmem_budget_and_limit()
    cb, steps = _pick_channel_block(C, Hp, Wp, P, budget)
    grid = (steps,)

    kernel = functools.partial(
        _smooth_kernel, taps=taps, cb=cb, hp=Hp, wp=Wp, pad=P,
        use_bf16=bool(use_bf16_rowpass),
    )

    # Advisory cost: banded matmul row pass + K-tap column pass; mem-bound.
    flops = 2 * C * Hp * Wp * Wp + 2 * K * C * Hp * Wp
    bytes_accessed = 2 * C * Hp * Wp * 4
    cost = pl.CostEstimate(
        flops=int(flops), transcendentals=0, bytes_accessed=int(bytes_accessed)
    )

    out = pl.pallas_call(
        kernel,
        out_shape=jax.ShapeDtypeStruct((C, Hp, Wp), jnp.float32),
        grid=grid,
        in_specs=[
            pl.BlockSpec((cb, Hp, Wp), lambda c: (c, 0, 0)),   # channel block
        ],
        out_specs=pl.BlockSpec((cb, Hp, Wp), lambda c: (c, 0, 0)),
        scratch_shapes=[pltpu.VMEM((cb, Hp + 2 * P, Wp), jnp.float32)],
        compiler_params=pltpu.CompilerParams(
            dimension_semantics=("parallel",),
            vmem_limit_bytes=int(vmem_limit),
        ),
        cost_estimate=cost,
    )(xp)

    if (Hp, Wp) != (H, W):
        out = out[:, :H, :W]
    return out.astype(x.dtype)


# --------------------------------------------------------------------------
# Pure-JAX reference (grouped conv2d, groups=C, same padding)
# --------------------------------------------------------------------------
def reference_conv(x, weight):
    C, H, W = x.shape
    K = weight.shape[0]
    P = (K - 1) // 2
    w_full = jnp.broadcast_to(weight[None, None, :, :], (C, 1, K, K))
    out = jax.lax.conv_general_dilated(
        x[None],                      # (1, C, H, W)
        w_full,                       # (C, 1, K, K)
        window_strides=(1, 1),
        padding=[(P, P), (P, P)],
        dimension_numbers=("NCHW", "OIHW", "NCHW"),
        feature_group_count=C,
    )
    return out[0]


if __name__ == "__main__":
    channels = 4
    H = W = 16
    kernel_size = 5
    sigma = 2.0

    key = jax.random.PRNGKey(0)
    x = jax.random.normal(key, (channels, H, W), dtype=jnp.float32)

    out = gaussian_smoothing(x, kernel_size, sigma)
    out = jax.block_until_ready(out)

    ref = jax.block_until_ready(
        reference_conv(x, make_gaussian_kernel(kernel_size, sigma, dim=2))
    )
    assert out.shape == (channels, H, W)
    assert out.dtype == jnp.float32
    err = float(jnp.max(jnp.abs(out - ref)))
    assert jnp.allclose(out, ref, atol=1e-5, rtol=1e-5), f"max abs err {err}"

    print("KERNEL_OK")
</pallas_src>

<mosaic_0001>
module attributes {stable_mosaic.version = 11 : i64} {
  func.func @_smooth_kernel(%arg0: i32, %arg1: memref<2x16x128xf32, #tpu.memory_space<vmem>>, %arg2: memref<2x16x128xf32, #tpu.memory_space<vmem>>, %arg3: memref<2x20x128xf32, #tpu.memory_space<vmem>>) attributes {dimension_semantics = [#tpu.dimension_semantics<parallel>], iteration_bounds = array<i64: 2>, scalar_prefetch = 0 : i64, scratch_operands = 1 : i64, tpu.core_type = #tpu.core_type<tc>, window_params = [{transform_indices = @transform_0, window_bounds = array<i64: 2, 16, 128>}, {transform_indices = @transform_1, window_bounds = array<i64: 2, 16, 128>}]} {
    %0 = tpu.iota {dimensions = array<i32: 0>} : vector<128x128xi32>
    %1 = tpu.iota {dimensions = array<i32: 1>} : vector<128x128xi32>
    %2 = arith.subi %0, %1 : vector<128x128xi32>
    %cst = arith.constant 0.000000e+00 : f32
    %3 = vector.broadcast %cst : f32 to vector<128x128xf32>
    %c-2_i32 = arith.constant -2 : i32
    %4 = vector.broadcast %c-2_i32 : i32 to vector<128x128xi32>
    %5 = arith.cmpi eq, %2, %4 : vector<128x128xi32>
    %cst_0 = arith.constant 0.175546825 : f32
    %cst_1 = arith.constant 0.000000e+00 : f32
    %6 = vector.broadcast %cst_0 : f32 to vector<128x128xf32>
    %7 = vector.broadcast %cst_1 : f32 to vector<128x128xf32>
    %8 = arith.select %5, %6, %7 : vector<128x128xi1>, vector<128x128xf32>
    %9 = arith.addf %3, %8 : vector<128x128xf32>
    %c-1_i32 = arith.constant -1 : i32
    %10 = vector.broadcast %c-1_i32 : i32 to vector<128x128xi32>
    %11 = arith.cmpi eq, %2, %10 : vector<128x128xi32>
    %cst_2 = arith.constant 0.211749882 : f32
    %cst_3 = arith.constant 0.000000e+00 : f32
    %12 = vector.broadcast %cst_2 : f32 to vector<128x128xf32>
    %13 = vector.broadcast %cst_3 : f32 to vector<128x128xf32>
    %14 = arith.select %11, %12, %13 : vector<128x128xi1>, vector<128x128xf32>
    %15 = arith.addf %9, %14 : vector<128x128xf32>
    %c0_i32 = arith.constant 0 : i32
    %16 = vector.broadcast %c0_i32 : i32 to vector<128x128xi32>
    %17 = arith.cmpi eq, %2, %16 : vector<128x128xi32>
    %cst_4 = arith.constant 0.225406587 : f32
    %cst_5 = arith.constant 0.000000e+00 : f32
    %18 = vector.broadcast %cst_4 : f32 to vector<128x128xf32>
    %19 = vector.broadcast %cst_5 : f32 to vector<128x128xf32>
    %20 = arith.select %17, %18, %19 : vector<128x128xi1>, vector<128x128xf32>
    %21 = arith.addf %15, %20 : vector<128x128xf32>
    %c1_i32 = arith.constant 1 : i32
    %22 = vector.broadcast %c1_i32 : i32 to vector<128x128xi32>
    %23 = arith.cmpi eq, %2, %22 : vector<128x128xi32>
    %cst_6 = arith.constant 0.211749882 : f32
    %cst_7 = arith.constant 0.000000e+00 : f32
    %24 = vector.broadcast %cst_6 : f32 to vector<128x128xf32>
    %25 = vector.broadcast %cst_7 : f32 to vector<128x128xf32>
    %26 = arith.select %23, %24, %25 : vector<128x128xi1>, vector<128x128xf32>
    %27 = arith.addf %21, %26 : vector<128x128xf32>
    %c2_i32 = arith.constant 2 : i32
    %28 = vector.broadcast %c2_i32 : i32 to vector<128x128xi32>
    %29 = arith.cmpi eq, %2, %28 : vector<128x128xi32>
    %cst_8 = arith.constant 0.175546825 : f32
    %cst_9 = arith.constant 0.000000e+00 : f32
    %30 = vector.broadcast %cst_8 : f32 to vector<128x128xf32>
    %31 = vector.broadcast %cst_9 : f32 to vector<128x128xf32>
    %32 = arith.select %29, %30, %31 : vector<128x128xi1>, vector<128x128xf32>
    %33 = arith.addf %27, %32 : vector<128x128xf32>
    %c0 = arith.constant 0 : index
    %c0_10 = arith.constant 0 : index
    %c0_11 = arith.constant 0 : index
    %34 = vector.load %arg1[%c0, %c0_10, %c0_11] : memref<2x16x128xf32, #tpu.memory_space<vmem>>, vector<2x16x128xf32>
    %35 = vector.shape_cast %34 : vector<2x16x128xf32> to vector<32x128xf32>
    %cst_12 = arith.constant dense<0.000000e+00> : vector<32x128xf32>
    %36 = tpu.matmul %35, %33, %cst_12 {dimension_numbers = #tpu.dot_dimension_numbers<[1], [0], [0], [1], [0, 0, 1, 1], [], []>} : vector<32x128xf32>, vector<128x128xf32>, vector<32x128xf32> -> vector<32x128xf32>
    %cst_13 = arith.constant 0.000000e+00 : f32
    %37 = vector.broadcast %cst_13 : f32 to vector<2x2x128xf32>
    %c0_14 = arith.constant 0 : index
    %c0_15 = arith.constant 0 : index
    %c0_16 = arith.constant 0 : index
    %38 = vector.load %arg3[%c0_14, %c0_15, %c0_16] : memref<2x20x128xf32, #tpu.memory_space<vmem>>, vector<2x2x128xf32>
    tpu.vector_store %arg3[%c0_14, %c0_15, %c0_16], %37 {strides = array<i32>} : memref<2x20x128xf32, #tpu.memory_space<vmem>>, vector<2x2x128xf32>,
    %c0_17 = arith.constant 0 : index
    %c18 = arith.constant 18 : index
    %c0_18 = arith.constant 0 : index
    %39 = vector.load %arg3[%c0_17, %c18, %c0_18] : memref<2x20x128xf32, #tpu.memory_space<vmem>>, vector<2x2x128xf32>
    tpu.vector_store %arg3[%c0_17, %c18, %c0_18], %37 {strides = array<i32>} : memref<2x20x128xf32, #tpu.memory_space<vmem>>, vector<2x2x128xf32>,
    %40 = vector.shape_cast %36 : vector<32x128xf32> to vector<2x16x128xf32>
    %c0_19 = arith.constant 0 : index
    %c2 = arith.constant 2 : index
    %c0_20 = arith.constant 0 : index
    %41 = vector.load %arg3[%c0_19, %c2, %c0_20] : memref<2x20x128xf32, #tpu.memory_space<vmem>>, vector<2x16x128xf32>
    tpu.vector_store %arg3[%c0_19, %c2, %c0_20], %40 {strides = array<i32>} : memref<2x20x128xf32, #tpu.memory_space<vmem>>, vector<2x16x128xf32>,
    %c0_21 = arith.constant 0 : index
    %c2_22 = arith.constant 2 : index
    %c0_23 = arith.constant 0 : index
    %42 = vector.load %arg3[%c0_21, %c2_22, %c0_23] : memref<2x20x128xf32, #tpu.memory_space<vmem>>, vector<2x16x128xf32>
    %cst_24 = arith.constant 0.225406587 : f32
    %43 = vector.broadcast %cst_24 : f32 to vector<2x16x128xf32>
    %44 = arith.mulf %43, %42 : vector<2x16x128xf32>
    %c0_25 = arith.constant 0 : index
    %c0_26 = arith.constant 0 : index
    %c0_27 = arith.constant 0 : index
    %45 = vector.load %arg3[%c0_25, %c0_26, %c0_27] : memref<2x20x128xf32, #tpu.memory_space<vmem>>, vector<2x16x128xf32>
    %c0_28 = arith.constant 0 : index
    %c4 = arith.constant 4 : index
    %c0_29 = arith.constant 0 : index
    %46 = vector.load %arg3[%c0_28, %c4, %c0_29] : memref<2x20x128xf32, #tpu.memory_space<vmem>>, vector<2x16x128xf32>
    %47 = arith.addf %45, %46 : vector<2x16x128xf32>
    %cst_30 = arith.constant 0.175546825 : f32
    %48 = vector.broadcast %cst_30 : f32 to vector<2x16x128xf32>
    %49 = arith.mulf %48, %47 : vector<2x16x128xf32>
    %50 = arith.addf %44, %49 : vector<2x16x128xf32>
    %c0_31 = arith.constant 0 : index
    %c1 = arith.constant 1 : index
    %c0_32 = arith.constant 0 : index
    %51 = vector.load %arg3[%c0_31, %c1, %c0_32] : memref<2x20x128xf32, #tpu.memory_space<vmem>>, vector<2x16x128xf32>
    %c0_33 = arith.constant 0 : index
    %c3 = arith.constant 3 : index
    %c0_34 = arith.constant 0 : index
    %52 = vector.load %arg3[%c0_33, %c3, %c0_34] : memref<2x20x128xf32, #tpu.memory_space<vmem>>, vector<2x16x128xf32>
    %53 = arith.addf %51, %52 : vector<2x16x128xf32>
    %cst_35 = arith.constant 0.211749882 : f32
    %54 = vector.broadcast %cst_35 : f32 to vector<2x16x128xf32>
    %55 = arith.mulf %54, %53 : vector<2x16x128xf32>
    %56 = arith.addf %50, %55 : vector<2x16x128xf32>
    %c0_36 = arith.constant 0 : index
    %c0_37 = arith.constant 0 : index
    %c0_38 = arith.constant 0 : index
    %57 = vector.load %arg2[%c0_36, %c0_37, %c0_38] : memref<2x16x128xf32, #tpu.memory_space<vmem>>, vector<2x16x128xf32>
    tpu.vector_store %arg2[%c0_36, %c0_37, %c0_38], %56 {strides = array<i32>} : memref<2x16x128xf32, #tpu.memory_space<vmem>>, vector<2x16x128xf32>,
    return
  }
  func.func @transform_0(%arg0: i32) -> (i32, i32, i32) {
    %c0_i32 = arith.constant 0 : i32
    %c0_i32_0 = arith.constant 0 : i32
    %c0_i32_1 = arith.constant 0 : i32
    return %arg0, %c0_i32, %c0_i32_0 : i32, i32, i32
  }
  func.func @transform_1(%arg0: i32) -> (i32, i32, i32) {
    %c0_i32 = arith.constant 0 : i32
    %c0_i32_0 = arith.constant 0 : i32
    %c0_i32_1 = arith.constant 0 : i32
    return %arg0, %c0_i32, %c0_i32_0 : i32, i32, i32
  }
}

</mosaic_0001>

<llo_original>
// kernel: tpu_custom_call.1
$region0: #{tpu_custom_call.1}
  #allocation0 [shape = 'u32[]', space=smem, size = 0x4, offset = 0x4, fixed_abs, tag = 'smem constant byte address 0x4 - core index']
  #allocation1 [shape = 'u32[72,128]{1,0:T(1,128)}', space=vmem, size = 0x9000, scoped, tag = 'internal scratch']
  #allocation2 [shape = 'f32[2,20,128]{2,1,0:T(8,128)}', space=vmem, size = 0x6000, scoped, tag = 'scratch operand']
  %s0 = inlined_call_operand.hbm [shape: f32[4,16,128], index: 0, kind: input, shape index: {}]
  %s1 = inlined_call_operand.hbm [shape: f32[4,16,128], index: 1, kind: output, shape index: {}]
  %s2 = sld [smem:[#allocation0]]
  $region41: #{tpu_custom_call.1} parent=0
    _
  %s4 = ssub.s32 1, %s2
  %s5 = scalar_select 0, %s4, %s2
  $region1: #{tpu_custom_call.1} parent=0
    #allocation3 [shape = 'u8[32768]{0}', space=vmem, size = 0x8000, scoped, tag = 'input window, operand 0']
    #allocation4 [shape = 's32[2]{0}', space=sflag, size = 0x8, scoped, tag = 'scoped memory for tpu_custom_call.1']
    #allocation5 [shape = 's32[2]{0}', space=sflag, size = 0x8, scoped, tag = 'scoped memory for tpu_custom_call.1']
    #allocation6 [shape = 'u8[32768]{0}', space=vmem, size = 0x8000, scoped, tag = 'output window, operand 0']
    %6 = vsyncpa [#allocation4], 0
    %s7 = scalar_lea.sflag [#allocation4], 1
    %8 = vsyncpa %s7, 0
    %9 = vsyncpa [#allocation5], 0
    %s10 = scalar_lea.sflag [#allocation5], 1
    %11 = vsyncpa %s10, 0
    loop: start=0, step=1, limit=4
    $region2: #{tpu_custom_call.1} parent=1 // loop_pre_header
      _
    $region3: #{tpu_custom_call.1} parent=1 // loop_header
      %s13 = sphi 0, %s17
      %p14 = scmp.ge.s32.totalorder %s13, 4
      %s23 = sphi 0, %s25
      %s26 = sphi 0, %s23
      %s27 = sphi 0, %s26
      %s43 = sphi 0, %s27
      %s49 = sphi 0, %s51
      %s52 = sphi 0, %s49
      %s53 = sphi 0, %s52
      %s69 = sphi 0, %s53
    $region4: #{tpu_custom_call.1} parent=1 // loop_header_branch
      %16 = sbr.rel (%p14) target = $region8
    $region5: #{tpu_custom_call.1} parent=1 // loop_body
      %s18 = ssub.s32 %s13, 1
      %s19 = ssub.s32 %s13, 2
      %s20 = sadd.s32 %s13, 1
      %s21 = ssub.s32 %s13, %s20
      %p22 = scmp.eq.s32.totalorder %s21, 0
      %s24 = sadd.s32 %s23, 1
      %s25 = scalar_select %p22, %s23, %s24
      %p28 = pneg %p22
      %p29 = scmp.eq.s32.totalorder %s13, 1
      %p30 = por %p28, %p29
      %p31 = scmp.ne.s32.totalorder %s23, %s26
      %p32 = scmp.eq.s32.totalorder %s13, 0
      %p33 = por %p31, %p32
      %p34 = scmp.ne.s32.totalorder %s23, %s26
      %p35 = scmp.eq.s32.totalorder %s18, 1
      %p36 = por %p34, %p35
      %p37 = scmp.ne.s32.totalorder %s26, %s27
      %p38 = scmp.eq.s32.totalorder %s18, 0
      %p39 = por %p37, %p38
      %p40 = scmp.ne.s32.totalorder %s26, %s27
      %p41 = scmp.eq.s32.totalorder %s19, 1
      %p42 = por %p40, %p41
      %p44 = scmp.ne.s32.totalorder %s27, %s43
      %p45 = scmp.eq.s32.totalorder %s19, 0
      %p46 = por %p44, %p45
      %s47 = ssub.s32 %s13, %s20
      %p48 = scmp.eq.s32.totalorder %s47, 0
      %s50 = sadd.s32 %s49, 1
      %s51 = scalar_select %p48, %s49, %s50
      %p54 = pneg %p48
      %p55 = scmp.eq.s32.totalorder %s13, 1
      %p56 = por %p54, %p55
      %p57 = scmp.ne.s32.totalorder %s49, %s52
      %p58 = scmp.eq.s32.totalorder %s13, 0
      %p59 = por %p57, %p58
      %p60 = scmp.ne.s32.totalorder %s49, %s52
      %p61 = scmp.eq.s32.totalorder %s18, 1
      %p62 = por %p60, %p61
      %p63 = scmp.ne.s32.totalorder %s52, %s53
      %p64 = scmp.eq.s32.totalorder %s18, 0
      %p65 = por %p63, %p64
      %p66 = scmp.ne.s32.totalorder %s52, %s53
      %p67 = scmp.eq.s32.totalorder %s19, 1
      %p68 = por %p66, %p67
      %p70 = scmp.ne.s32.totalorder %s53, %s69
      %p71 = scmp.eq.s32.totalorder %s19, 0
      %p72 = por %p70, %p71
      %p73 = scmp.le.s32.totalorder 1, %s13
      %p74 = scmp.lt.s32.totalorder %s13, 3
      %p75 = pnand %p73, %p74
      %p76 = pneg %p75
      // Predicated region
      $region9: #{tpu_custom_call.1} parent=5 // pred_check
        _
      $region10: #{tpu_custom_call.1} parent=5 // pred_check_branch
        %78 = sbr.rel (%p75) target = $region12
      $region11: #{tpu_custom_call.1} parent=5 // pred_region
        %s79 = ssub.s32 %s13, 1
      $region12: #{tpu_custom_call.1} parent=5 // pred_fallthru
        _
      %p80 = scmp.lt.s32.totalorder %s13, 2
      // Predicated region
      $region13: #{tpu_custom_call.1} parent=5 // pred_check
        %p81 = pneg %p80
      $region14: #{tpu_custom_call.1} parent=5 // pred_check_branch
        %83 = sbr.rel (%p81) target = $region16
      $region15: #{tpu_custom_call.1} parent=5 // pred_region
        // Predicated region
        $region17: #{tpu_custom_call.1} parent=15 // pred_check
          %p84 = pneg %p33
        $region18: #{tpu_custom_call.1} parent=15 // pred_check_branch
          %86 = sbr.rel (%p84) target = $region20
        $region19: #{tpu_custom_call.1} parent=15 // pred_region
          %s87 = sand.u32 %s23, 1
          %s88 = scalar_lea.sflag [#allocation4], %s87
          %s89 = sand.u32 %s23, 1
          %s90 = smul.addr %s89, 32
          %s91 = scalar_lea.vmem [#allocation3], %s90
          %s92 = smul.u32 2, %s13
          %94 = vsyncadd %s88, 0
          %s95 = smul.addr %s92, 2
          %s96 = smul.addr %s95, 8
          %s97 = scalar_lea.hbm %s0, %s96
          %s98 = sshll.u32 %s97, 4
          %s99 = int_to_ptr.hbm [resolvable:$true] %s98
          %s100 = sshll.u32 %s91, 4
          %s101 = int_to_ptr.vmem [resolvable:$true] %s100
          %106 = dma.hbm_to_vmem [thread:$0]  %s99, 512, %s101, %s88, 128, 128, 8
        $region20: #{tpu_custom_call.1} parent=15 // pred_fallthru
          _
      $region16: #{tpu_custom_call.1} parent=5 // pred_fallthru
        _
      %p107 = scmp.le.s32.totalorder 1, %s13
      %p108 = scmp.lt.s32.totalorder %s13, 3
      %p109 = pnand %p107, %p108
      %p110 = pneg %p109
      // Predicated region
      $region21: #{tpu_custom_call.1} parent=5 // pred_check
        _
      $region22: #{tpu_custom_call.1} parent=5 // pred_check_branch
        %112 = sbr.rel (%p109) target = $region24
      $region23: #{tpu_custom_call.1} parent=5 // pred_region
        %s113 = ssub.s32 %s13, 1
        %s114 = sand.u32 %s26, 1
        %s115 = scalar_lea.sflag [#allocation4], %s114
        %s116 = sand.u32 %s26, 1
        %s117 = smul.addr %s116, 32
        %s118 = scalar_lea.vmem [#allocation3], %s117
        // Predicated region
        $region25: #{tpu_custom_call.1} parent=23 // pred_check
          %p119 = pneg %p39
        $region26: #{tpu_custom_call.1} parent=23 // pred_check_branch
          %121 = sbr.rel (%p119) target = $region28
        $region27: #{tpu_custom_call.1} parent=23 // pred_region
          %123 = dma.done %s115, 512
        $region28: #{tpu_custom_call.1} parent=23 // pred_fallthru
          _
        %s124 = sand.u32 %s26, 1
        %s125 = scalar_lea.sflag [#allocation4], %s124
        %s126 = sand.u32 %s26, 1
        %s127 = smul.addr %s126, 32
        %s128 = scalar_lea.vmem [#allocation3], %s127
        %p129 = pneg %p39
        %p130 = pneg %p36
        %p131 = pneg %p65
        %p132 = pneg %p62
        %s133 = sand.u32 %s52, 1
        %s134 = scalar_lea.sflag [#allocation5], %s133
        %s135 = sand.u32 %s52, 1
        %s136 = smul.addr %s135, 32
        %s137 = scalar_lea.vmem [#allocation6], %s136
        %s138 = smul.u32 2, %s18
        %s139 = smul.u32 2, %s18
        %v140 = vlaneseq
        %v141 = vshrl.u32 %v140, 7
        %v142 = vadd.s32 %v141, 8
        %v143 = vadd.s32 %v141, 16
        %v144 = vadd.s32 %v141, 24
        %v145 = vadd.s32 %v141, 32
        %v146 = vadd.s32 %v141, 40
        %v147 = vadd.s32 %v141, 48
        %v148 = vadd.s32 %v141, 56
        %v149 = vadd.s32 %v141, 64
        %v150 = vadd.s32 %v141, 72
        %v151 = vadd.s32 %v141, 80
        %v152 = vadd.s32 %v141, 88
        %v153 = vadd.s32 %v141, 96
        %v154 = vadd.s32 %v141, 104
        %v155 = vadd.s32 %v141, 112
        %v156 = vadd.s32 %v141, 120
        %v157 = vlaneseq
        %v158 = vand.u32 %v157, 127
        %v159 = vsub.s32 %v141, %v158
        %v160 = vsub.s32 %v142, %v158
        %v161 = vsub.s32 %v143, %v158
        %v162 = vsub.s32 %v144, %v158
        %v163 = vsub.s32 %v145, %v158
        %v164 = vsub.s32 %v146, %v158
        %v165 = vsub.s32 %v147, %v158
        %v166 = vsub.s32 %v148, %v158
        %v167 = vsub.s32 %v149, %v158
        %v168 = vsub.s32 %v150, %v158
        %v169 = vsub.s32 %v151, %v158
        %v170 = vsub.s32 %v152, %v158
        %v171 = vsub.s32 %v153, %v158
        %v172 = vsub.s32 %v154, %v158
        %v173 = vsub.s32 %v155, %v158
        %v174 = vsub.s32 %v156, %v158
        %vm175 = vcmp.eq.s32.totalorder %v159, 4294967294
        %vm176 = vcmp.eq.s32.totalorder %v160, 4294967294
        %vm177 = vcmp.eq.s32.totalorder %v161, 4294967294
        %vm178 = vcmp.eq.s32.totalorder %v162, 4294967294
        %vm179 = vcmp.eq.s32.totalorder %v163, 4294967294
        %vm180 = vcmp.eq.s32.totalorder %v164, 4294967294
        %vm181 = vcmp.eq.s32.totalorder %v165, 4294967294
        %vm182 = vcmp.eq.s32.totalorder %v166, 4294967294
        %vm183 = vcmp.eq.s32.totalorder %v167, 4294967294
        %vm184 = vcmp.eq.s32.totalorder %v168, 4294967294
        %vm185 = vcmp.eq.s32.totalorder %v169, 4294967294
        %vm186 = vcmp.eq.s32.totalorder %v170, 4294967294
        %vm187 = vcmp.eq.s32.totalorder %v171, 4294967294
        %vm188 = vcmp.eq.s32.totalorder %v172, 4294967294
        %vm189 = vcmp.eq.s32.totalorder %v173, 4294967294
        %vm190 = vcmp.eq.s32.totalorder %v174, 4294967294
        %v191 = vsel %vm175, 0.17554682, 0.0
        %v192 = vsel %vm176, 0.17554682, 0.0
        %v193 = vsel %vm177, 0.17554682, 0.0
        %v194 = vsel %vm178, 0.17554682, 0.0
        %v195 = vsel %vm179, 0.17554682, 0.0
        %v196 = vsel %vm180, 0.17554682, 0.0
        %v197 = vsel %vm181, 0.17554682, 0.0
        %v198 = vsel %vm182, 0.17554682, 0.0
        %v199 = vsel %vm183, 0.17554682, 0.0
        %v200 = vsel %vm184, 0.17554682, 0.0
        %v201 = vsel %vm185, 0.17554682, 0.0
        %v202 = vsel %vm186, 0.17554682, 0.0
        %v203 = vsel %vm187, 0.17554682, 0.0
        %v204 = vsel %vm188, 0.17554682, 0.0
        %v205 = vsel %vm189, 0.17554682, 0.0
        %v206 = vsel %vm190, 0.17554682, 0.0
        %v207 = vadd.f32 %v191, 0.0
        %v208 = vadd.f32 %v192, 0.0
        %v209 = vadd.f32 %v193, 0.0
        %v210 = vadd.f32 %v194, 0.0
        %v211 = vadd.f32 %v195, 0.0
        %v212 = vadd.f32 %v196, 0.0
        %v213 = vadd.f32 %v197, 0.0
        %v214 = vadd.f32 %v198, 0.0
        %v215 = vadd.f32 %v199, 0.0
        %v216 = vadd.f32 %v200, 0.0
        %v217 = vadd.f32 %v201, 0.0
        %v218 = vadd.f32 %v202, 0.0
        %v219 = vadd.f32 %v203, 0.0
        %v220 = vadd.f32 %v204, 0.0
        %v221 = vadd.f32 %v205, 0.0
        %v222 = vadd.f32 %v206, 0.0
        %vm223 = vcmp.eq.s32.totalorder %v159, 4294967295
        %vm224 = vcmp.eq.s32.totalorder %v160, 4294967295
        %vm225 = vcmp.eq.s32.totalorder %v161, 4294967295
        %vm226 = vcmp.eq.s32.totalorder %v162, 4294967295
        %vm227 = vcmp.eq.s32.totalorder %v163, 4294967295
        %vm228 = vcmp.eq.s32.totalorder %v164, 4294967295
        %vm229 = vcmp.eq.s32.totalorder %v165, 4294967295
        %vm230 = vcmp.eq.s32.totalorder %v166, 4294967295
        %vm231 = vcmp.eq.s32.totalorder %v167, 4294967295
        %vm232 = vcmp.eq.s32.totalorder %v168, 4294967295
        %vm233 = vcmp.eq.s32.totalorder %v169, 4294967295
        %vm234 = vcmp.eq.s32.totalorder %v170, 4294967295
        %vm235 = vcmp.eq.s32.totalorder %v171, 4294967295
        %vm236 = vcmp.eq.s32.totalorder %v172, 4294967295
        %vm237 = vcmp.eq.s32.totalorder %v173, 4294967295
        %vm238 = vcmp.eq.s32.totalorder %v174, 4294967295
        %v239 = vsel %vm223, 0.21174988, 0.0
        %v240 = vsel %vm224, 0.21174988, 0.0
        %v241 = vsel %vm225, 0.21174988, 0.0
        %v242 = vsel %vm226, 0.21174988, 0.0
        %v243 = vsel %vm227, 0.21174988, 0.0
        %v244 = vsel %vm228, 0.21174988, 0.0
        %v245 = vsel %vm229, 0.21174988, 0.0
        %v246 = vsel %vm230, 0.21174988, 0.0
        %v247 = vsel %vm231, 0.21174988, 0.0
        %v248 = vsel %vm232, 0.21174988, 0.0
        %v249 = vsel %vm233, 0.21174988, 0.0
        %v250 = vsel %vm234, 0.21174988, 0.0
        %v251 = vsel %vm235, 0.21174988, 0.0
        %v252 = vsel %vm236, 0.21174988, 0.0
        %v253 = vsel %vm237, 0.21174988, 0.0
        %v254 = vsel %vm238, 0.21174988, 0.0
        %v255 = vadd.f32 %v207, %v239
        %v256 = vadd.f32 %v208, %v240
        %v257 = vadd.f32 %v209, %v241
        %v258 = vadd.f32 %v210, %v242
        %v259 = vadd.f32 %v211, %v243
        %v260 = vadd.f32 %v212, %v244
        %v261 = vadd.f32 %v213, %v245
        %v262 = vadd.f32 %v214, %v246
        %v263 = vadd.f32 %v215, %v247
        %v264 = vadd.f32 %v216, %v248
        %v265 = vadd.f32 %v217, %v249
        %v266 = vadd.f32 %v218, %v250
        %v267 = vadd.f32 %v219, %v251
        %v268 = vadd.f32 %v220, %v252
        %v269 = vadd.f32 %v221, %v253
        %v270 = vadd.f32 %v222, %v254
        %vm271 = vcmp.eq.s32.totalorder %v159, 0
        %vm272 = vcmp.eq.s32.totalorder %v160, 0
        %vm273 = vcmp.eq.s32.totalorder %v161, 0
        %vm274 = vcmp.eq.s32.totalorder %v162, 0
        %vm275 = vcmp.eq.s32.totalorder %v163, 0
        %vm276 = vcmp.eq.s32.totalorder %v164, 0
        %vm277 = vcmp.eq.s32.totalorder %v165, 0
        %vm278 = vcmp.eq.s32.totalorder %v166, 0
        %vm279 = vcmp.eq.s32.totalorder %v167, 0
        %vm280 = vcmp.eq.s32.totalorder %v168, 0
        %vm281 = vcmp.eq.s32.totalorder %v169, 0
        %vm282 = vcmp.eq.s32.totalorder %v170, 0
        %vm283 = vcmp.eq.s32.totalorder %v171, 0
        %vm284 = vcmp.eq.s32.totalorder %v172, 0
        %vm285 = vcmp.eq.s32.totalorder %v173, 0
        %vm286 = vcmp.eq.s32.totalorder %v174, 0
        %v287 = vsel %vm271, 0.22540659, 0.0
        %v288 = vsel %vm272, 0.22540659, 0.0
        %v289 = vsel %vm273, 0.22540659, 0.0
        %v290 = vsel %vm274, 0.22540659, 0.0
        %v291 = vsel %vm275, 0.22540659, 0.0
        %v292 = vsel %vm276, 0.22540659, 0.0
        %v293 = vsel %vm277, 0.22540659, 0.0
        %v294 = vsel %vm278, 0.22540659, 0.0
        %v295 = vsel %vm279, 0.22540659, 0.0
        %v296 = vsel %vm280, 0.22540659, 0.0
        %v297 = vsel %vm281, 0.22540659, 0.0
        %v298 = vsel %vm282, 0.22540659, 0.0
        %v299 = vsel %vm283, 0.22540659, 0.0
        %v300 = vsel %vm284, 0.22540659, 0.0
        %v301 = vsel %vm285, 0.22540659, 0.0
        %v302 = vsel %vm286, 0.22540659, 0.0
        %v303 = vadd.f32 %v255, %v287
        %v304 = vadd.f32 %v256, %v288
        %v305 = vadd.f32 %v257, %v289
        %v306 = vadd.f32 %v258, %v290
        %v307 = vadd.f32 %v259, %v291
        %v308 = vadd.f32 %v260, %v292
        %v309 = vadd.f32 %v261, %v293
        %v310 = vadd.f32 %v262, %v294
        %v311 = vadd.f32 %v263, %v295
        %v312 = vadd.f32 %v264, %v296
        %v313 = vadd.f32 %v265, %v297
        %v314 = vadd.f32 %v266, %v298
        %v315 = vadd.f32 %v267, %v299
        %v316 = vadd.f32 %v268, %v300
        %v317 = vadd.f32 %v269, %v301
        %v318 = vadd.f32 %v270, %v302
        %vm319 = vcmp.eq.s32.totalorder %v159, 1
        %vm320 = vcmp.eq.s32.totalorder %v160, 1
        %vm321 = vcmp.eq.s32.totalorder %v161, 1
        %vm322 = vcmp.eq.s32.totalorder %v162, 1
        %vm323 = vcmp.eq.s32.totalorder %v163, 1
        %vm324 = vcmp.eq.s32.totalorder %v164, 1
        %vm325 = vcmp.eq.s32.totalorder %v165, 1
        %vm326 = vcmp.eq.s32.totalorder %v166, 1
        %vm327 = vcmp.eq.s32.totalorder %v167, 1
        %vm328 = vcmp.eq.s32.totalorder %v168, 1
        %vm329 = vcmp.eq.s32.totalorder %v169, 1
        %vm330 = vcmp.eq.s32.totalorder %v170, 1
        %vm331 = vcmp.eq.s32.totalorder %v171, 1
        %vm332 = vcmp.eq.s32.totalorder %v172, 1
        %vm333 = vcmp.eq.s32.totalorder %v173, 1
        %vm334 = vcmp.eq.s32.totalorder %v174, 1
        %v335 = vsel %vm319, 0.21174988, 0.0
        %v336 = vsel %vm320, 0.21174988, 0.0
        %v337 = vsel %vm321, 0.21174988, 0.0
        %v338 = vsel %vm322, 0.21174988, 0.0
        %v339 = vsel %vm323, 0.21174988, 0.0
        %v340 = vsel %vm324, 0.21174988, 0.0
        %v341 = vsel %vm325, 0.21174988, 0.0
        %v342 = vsel %vm326, 0.21174988, 0.0
        %v343 = vsel %vm327, 0.21174988, 0.0
        %v344 = vsel %vm328, 0.21174988, 0.0
        %v345 = vsel %vm329, 0.21174988, 0.0
        %v346 = vsel %vm330, 0.21174988, 0.0
        %v347 = vsel %vm331, 0.21174988, 0.0
        %v348 = vsel %vm332, 0.21174988, 0.0
        %v349 = vsel %vm333, 0.21174988, 0.0
        %v350 = vsel %vm334, 0.21174988, 0.0
        %v351 = vadd.f32 %v303, %v335
        %v352 = vadd.f32 %v304, %v336
        %v353 = vadd.f32 %v305, %v337
        %v354 = vadd.f32 %v306, %v338
        %v355 = vadd.f32 %v307, %v339
        %v356 = vadd.f32 %v308, %v340
        %v357 = vadd.f32 %v309, %v341
        %v358 = vadd.f32 %v310, %v342
        %v359 = vadd.f32 %v311, %v343
        %v360 = vadd.f32 %v312, %v344
        %v361 = vadd.f32 %v313, %v345
        %v362 = vadd.f32 %v314, %v346
        %v363 = vadd.f32 %v315, %v347
        %v364 = vadd.f32 %v316, %v348
        %v365 = vadd.f32 %v317, %v349
        %v366 = vadd.f32 %v318, %v350
        %vm367 = vcmp.eq.s32.totalorder %v159, 2
        %vm368 = vcmp.eq.s32.totalorder %v160, 2
        %vm369 = vcmp.eq.s32.totalorder %v161, 2
        %vm370 = vcmp.eq.s32.totalorder %v162, 2
        %vm371 = vcmp.eq.s32.totalorder %v163, 2
        %vm372 = vcmp.eq.s32.totalorder %v164, 2
        %vm373 = vcmp.eq.s32.totalorder %v165, 2
        %vm374 = vcmp.eq.s32.totalorder %v166, 2
        %vm375 = vcmp.eq.s32.totalorder %v167, 2
        %vm376 = vcmp.eq.s32.totalorder %v168, 2
        %vm377 = vcmp.eq.s32.totalorder %v169, 2
        %vm378 = vcmp.eq.s32.totalorder %v170, 2
        %vm379 = vcmp.eq.s32.totalorder %v171, 2
        %vm380 = vcmp.eq.s32.totalorder %v172, 2
        %vm381 = vcmp.eq.s32.totalorder %v173, 2
        %vm382 = vcmp.eq.s32.totalorder %v174, 2
        %v383 = vsel %vm367, 0.17554682, 0.0
        %v384 = vsel %vm368, 0.17554682, 0.0
        %v385 = vsel %vm369, 0.17554682, 0.0
        %v386 = vsel %vm370, 0.17554682, 0.0
        %v387 = vsel %vm371, 0.17554682, 0.0
        %v388 = vsel %vm372, 0.17554682, 0.0
        %v389 = vsel %vm373, 0.17554682, 0.0
        %v390 = vsel %vm374, 0.17554682, 0.0
        %v391 = vsel %vm375, 0.17554682, 0.0
        %v392 = vsel %vm376, 0.17554682, 0.0
        %v393 = vsel %vm377, 0.17554682, 0.0
        %v394 = vsel %vm378, 0.17554682, 0.0
        %v395 = vsel %vm379, 0.17554682, 0.0
        %v396 = vsel %vm380, 0.17554682, 0.0
        %v397 = vsel %vm381, 0.17554682, 0.0
        %v398 = vsel %vm382, 0.17554682, 0.0
        %v399 = vadd.f32 %v351, %v383
        %v400 = vadd.f32 %v352, %v384
        %v401 = vadd.f32 %v353, %v385
        %v402 = vadd.f32 %v354, %v386
        %v403 = vadd.f32 %v355, %v387
        %v404 = vadd.f32 %v356, %v388
        %v405 = vadd.f32 %v357, %v389
        %v406 = vadd.f32 %v358, %v390
        %v407 = vadd.f32 %v359, %v391
        %v408 = vadd.f32 %v360, %v392
        %v409 = vadd.f32 %v361, %v393
        %v410 = vadd.f32 %v362, %v394
        %v411 = vadd.f32 %v363, %v395
        %v412 = vadd.f32 %v364, %v396
        %v413 = vadd.f32 %v365, %v397
        %v414 = vadd.f32 %v366, %v398
        %v415 = vld [vmem:[%s118] sm:$0xff]
        %v416 = vld [vmem:[%s118 + $0x8] sm:$0xff]
        %v417 = vld [vmem:[%s118 + $0x10] sm:$0xff]
        %v418 = vld [vmem:[%s118 + $0x18] sm:$0xff]
        %419 = vmatpush.msra.mxu0 %v414
        %420 = vmatpush.msra.mxu0 %v413
        %421 = vmatpush.msra.mxu0 %v412
        %422 = vmatpush.msra.mxu0 %v411
        %423 = vmatpush.msra.mxu0 %v410
        %424 = vmatpush.msra.mxu0 %v409
        %425 = vmatpush.msra.mxu0 %v408
        %426 = vmatpush.msra.mxu0 %v407
        %427 = vmatpush.msra.mxu0 %v406
        %428 = vmatpush.msra.mxu0 %v405
        %429 = vmatpush.msra.mxu0 %v404
        %430 = vmatpush.msra.mxu0 %v403
        %431 = vmatpush.msra.mxu0 %v402
        %432 = vmatpush.msra.mxu0 %v401
        %433 = vmatpush.msra.mxu0 %v400
        %434 = vmatpush.msra.mxu0 %v399
        %435 = vmatmul.f32.gmra.mxu0 %v415
        %v436 = vpop.f32.mrf.mxu0
        %v437 = vadd.f32 0.0, %v436
        %438 = vmatmul.f32.gmra.mxu0 %v416
        %v439 = vpop.f32.mrf.mxu0
        %v440 = vadd.f32 0.0, %v439
        %441 = vmatmul.f32.gmra.mxu0 %v417
        %v442 = vpop.f32.mrf.mxu0
        %v443 = vadd.f32 0.0, %v442
        %444 = vmatmul.f32.gmra.mxu0 %v418
        %v445 = vpop.f32.mrf.mxu0
        %v446 = vadd.f32 0.0, %v445
        %447 = vdwg.mxu0
        %448 = vst [vmem:[#allocation2] sm:$0x3] 0.0
        %449 = vst [vmem:[#allocation2 + $0x18] sm:$0x3] 0.0
        %450 = vst [vmem:[#allocation2 + $0x12] sm:$0x3] 0.0
        %451 = vst [vmem:[#allocation2 + $0x2a] sm:$0x3] 0.0
        %452 = vst [vmem:[#allocation2 + $0x2] sm:$0xff] %v437
        %453 = vst [vmem:[#allocation2 + $0xa] sm:$0xff] %v440
        %454 = vst [vmem:[#allocation2 + $0x1a] sm:$0xff] %v443
        %455 = vst [vmem:[#allocation2 + $0x22] sm:$0xff] %v446
        %v456 = vld [vmem:[#allocation2 + $0x2] sm:$0xff]
        %v457 = vld [vmem:[#allocation2 + $0xa] sm:$0xff]
        %v458 = vld [vmem:[#allocation2 + $0x1a] sm:$0xff]
        %v459 = vld [vmem:[#allocation2 + $0x22] sm:$0xff]
        %v460 = vmul.f32 %v456, 0.22540659
        %v461 = vmul.f32 %v457, 0.22540659
        %v462 = vmul.f32 %v458, 0.22540659
        %v463 = vmul.f32 %v459, 0.22540659
        %v464 = vld [vmem:[#allocation2] sm:$0xff]
        %v465 = vld [vmem:[#allocation2 + $0x8] sm:$0xff]
        %v466 = vld [vmem:[#allocation2 + $0x18] sm:$0xff]
        %v467 = vld [vmem:[#allocation2 + $0x20] sm:$0xff]
        %v468 = vld [vmem:[#allocation2 + $0x4] sm:$0xff]
        %v469 = vld [vmem:[#allocation2 + $0xc] sm:$0xff]
        %v470 = vld [vmem:[#allocation2 + $0x1c] sm:$0xff]
        %v471 = vld [vmem:[#allocation2 + $0x24] sm:$0xff]
        %v472 = vadd.f32 %v464, %v468
        %v473 = vadd.f32 %v465, %v469
        %v474 = vadd.f32 %v466, %v470
        %v475 = vadd.f32 %v467, %v471
        %v476 = vmul.f32 %v472, 0.17554682
        %v477 = vmul.f32 %v473, 0.17554682
        %v478 = vmul.f32 %v474, 0.17554682
        %v479 = vmul.f32 %v475, 0.17554682
        %v480 = vadd.f32 %v460, %v476
        %v481 = vadd.f32 %v461, %v477
        %v482 = vadd.f32 %v462, %v478
        %v483 = vadd.f32 %v463, %v479
        %v484 = vld [vmem:[#allocation2 + $0x1] sm:$0xff]
        %v485 = vld [vmem:[#allocation2 + $0x9] sm:$0xff]
        %v486 = vld [vmem:[#allocation2 + $0x19] sm:$0xff]
        %v487 = vld [vmem:[#allocation2 + $0x21] sm:$0xff]
        %v488 = vld [vmem:[#allocation2 + $0x3] sm:$0xff]
        %v489 = vld [vmem:[#allocation2 + $0xb] sm:$0xff]
        %v490 = vld [vmem:[#allocation2 + $0x1b] sm:$0xff]
        %v491 = vld [vmem:[#allocation2 + $0x23] sm:$0xff]
        %v492 = vadd.f32 %v484, %v488
        %v493 = vadd.f32 %v485, %v489
        %v494 = vadd.f32 %v486, %v490
        %v495 = vadd.f32 %v487, %v491
        %v496 = vmul.f32 %v492, 0.21174988
        %v497 = vmul.f32 %v493, 0.21174988
        %v498 = vmul.f32 %v494, 0.21174988
        %v499 = vmul.f32 %v495, 0.21174988
        %v500 = vadd.f32 %v480, %v496
        %v501 = vadd.f32 %v481, %v497
        %v502 = vadd.f32 %v482, %v498
        %v503 = vadd.f32 %v483, %v499
        %504 = vst [vmem:[%s137] sm:$0xff] %v500
        %505 = vst [vmem:[%s137 + $0x8] sm:$0xff] %v501
        %506 = vst [vmem:[%s137 + $0x10] sm:$0xff] %v502
        %507 = vst [vmem:[%s137 + $0x18] sm:$0xff] %v503
        %s508 = sand.u32 %s52, 1
        %s509 = scalar_lea.sflag [#allocation5], %s508
        %s510 = sand.u32 %s52, 1
        %s511 = smul.addr %s510, 32
        %s512 = scalar_lea.vmem [#allocation6], %s511
        // Predicated region
        $region29: #{tpu_custom_call.1} parent=23 // pred_check
          %p513 = pneg %p62
        $region30: #{tpu_custom_call.1} parent=23 // pred_check_branch
          %515 = sbr.rel (%p513) target = $region32
        $region31: #{tpu_custom_call.1} parent=23 // pred_region
          %s516 = smul.u32 2, %s18
          %518 = vsyncadd %s509, 0
          %s519 = smul.addr %s516, 2
          %s520 = smul.addr %s519, 8
          %s521 = scalar_lea.hbm %s1, %s520
          %s522 = sshll.u32 %s512, 4
          %s523 = int_to_ptr.vmem [resolvable:$true] %s522
          %s524 = sshll.u32 %s521, 4
          %s525 = int_to_ptr.hbm [resolvable:$true] %s524
          %530 = dma.vmem_to_hbm [thread:$0]  %s523, 512, %s525, %s509, 128, 128, 8
        $region32: #{tpu_custom_call.1} parent=23 // pred_fallthru
          _
      $region24: #{tpu_custom_call.1} parent=5 // pred_fallthru
        _
      %p531 = scmp.le.s32.totalorder 2, %s13
      // Predicated region
      $region33: #{tpu_custom_call.1} parent=5 // pred_check
        %p532 = pneg %p531
      $region34: #{tpu_custom_call.1} parent=5 // pred_check_branch
        %534 = sbr.rel (%p532) target = $region36
      $region35: #{tpu_custom_call.1} parent=5 // pred_region
        %s535 = ssub.s32 %s13, 2
        // Predicated region
        $region37: #{tpu_custom_call.1} parent=35 // pred_check
          %p536 = pneg %p68
        $region38: #{tpu_custom_call.1} parent=35 // pred_check_branch
          %538 = sbr.rel (%p536) target = $region40
        $region39: #{tpu_custom_call.1} parent=35 // pred_region
          %s539 = sand.u32 %s53, 1
          %s540 = scalar_lea.sflag [#allocation5], %s539
          %s541 = sand.u32 %s53, 1
          %s542 = smul.addr %s541, 32
          %s543 = scalar_lea.vmem [#allocation6], %s542
          %545 = dma.done %s540, 512
        $region40: #{tpu_custom_call.1} parent=35 // pred_fallthru
          _
      $region36: #{tpu_custom_call.1} parent=5 // pred_fallthru
        _
    $region6: #{tpu_custom_call.1} parent=1 // loop_footer
      %s17 = sadd.s32 1, %s13
    $region7: #{tpu_custom_call.1} parent=1 // loop_footer_branch
      %12 = sbr.rel target = $region3
    $region8: #{tpu_custom_call.1} parent=1 // loop_exit
      _
    %546 = vsyncpa [#allocation4], 1
    %s547 = scalar_lea.sflag [#allocation4], 1
    %548 = vsyncpa %s547, 1
    %549 = vsyncpa [#allocation5], 1
    %s550 = scalar_lea.sflag [#allocation5], 1
    %551 = vsyncpa %s550, 1

</llo_original>
